<compile_context>
chip_gen: v7x
topology: tpu7x:2x2x1
jax: 0.10.0
libtpu: 0.0.40
codegen_flags: <defaults>
</compile_context>

<pallas_src>
import functools

import jax
import jax.numpy as jnp
from jax import lax
from jax.experimental import pallas as pl
from jax.experimental.pallas import tpu as pltpu

LANE = 128


def _round_up(v, m):
    return (v + m - 1) // m * m


def egnn_kernel(row_ref, col_ref, hx_ref, wcat_ref, bcat_ref, out_ref, *, F, D):
    """Process one edge tile: fused gather -> fused Linear -> fused scatter-add."""
    k = pl.program_id(0)

    # Initialize the resident output slab with [h | x | 0] once.
    @pl.when(k == 0)
    def _():
        out_ref[...] = hx_ref[...]

    TE = row_ref.shape[0]
    N = hx_ref.shape[0]
    W = hx_ref.shape[1]          # lane-dense slab width (= round_up(F+D, 128))

    row = row_ref[...]           # [TE, 1] int32
    col = col_ref[...]           # [TE, 1] int32

    # One-hot edge->node selection matrices built on-chip. Padded edges carry
    # index == N which matches no node id -> all-zero rows -> inert.
    node_ids = lax.broadcasted_iota(jnp.int32, (TE, N), 1)
    row_oh = (node_ids == row).astype(jnp.float32)        # [TE, N]
    col_oh = (node_ids == col).astype(jnp.float32)        # [TE, N]

    hx = hx_ref[...]                                      # [N, W] = [h | x | 0]

    # Fused, lane-dense gathers (h and x gathered together in one pass each):
    #   g_col[:, :F]     = h[col],   g_col[:, F:F+D] = x[col]
    #   g_row[:, F:F+D]  = x[row]
    g_col = jnp.dot(col_oh, hx, preferred_element_type=jnp.float32)   # [TE, W]
    g_row = jnp.dot(row_oh, hx, preferred_element_type=jnp.float32)   # [TE, W]

    # Fused Linear: W_cat = [W_h | W_x | 0] with zero rows for x/pad columns,
    # so feeding the full gathered slab is exact.  m in [:, :F], w in [:, F].
    mw = jnp.dot(g_col, wcat_ref[...], preferred_element_type=jnp.float32)
    mw = jnp.maximum(mw + bcat_ref[...], 0.0)             # [TE, W]

    # Build the fused scatter operand [m | weighted_delta | 0] without any
    # narrow concatenation: mask by lane index.
    lane_ids = lax.broadcasted_iota(jnp.int32, (TE, W), 1)
    m_slab = jnp.where(lane_ids < F, mw, 0.0)             # keep relu(fc_h) cols
    w = mw[:, F:F + 1]                                    # [TE, 1] relu(fc_x)
    x_cols = (lane_ids >= F) & (lane_ids < F + D)
    delta_slab = jnp.where(x_cols, (g_row - g_col) * w, 0.0)  # weighted delta_x
    cat = m_slab + delta_slab                             # [TE, W]

    # Fused scatter-add over `row` for BOTH reductions: row_oh^T @ cat
    # (contract the edge axis), accumulated into the resident output slab.
    out_ref[...] += lax.dot_general(
        row_oh, cat, (((0,), (0,)), ((), ())),
        preferred_element_type=jnp.float32)


def egnn_layer(h, x, edge_index, W_h, b_h, W_x, b_x, *, tile_e=256):
    """h: [N,F] f32, x: [N,D] f32, edge_index: [2,E] int, W_h: [F,F], W_x: [F,1]."""
    N, F = h.shape
    D = x.shape[1]
    E = edge_index.shape[1]

    W_node = _round_up(F + D, LANE)                 # lane-dense slab width

    # Edge tile size: multiple of 8, no larger than needed.
    tile_e = max(8, min(_round_up(tile_e, 8), _round_up(E, 8)))
    E_pad = _round_up(E, tile_e)

    row = edge_index[0].astype(jnp.int32)
    col = edge_index[1].astype(jnp.int32)
    pad_e = E_pad - E
    if pad_e:
        # Out-of-range index N -> all-zero one-hot rows -> padded edges inert.
        row = jnp.concatenate([row, jnp.full((pad_e,), N, jnp.int32)])
        col = jnp.concatenate([col, jnp.full((pad_e,), N, jnp.int32)])
    row = row.reshape(E_pad, 1)
    col = col.reshape(E_pad, 1)

    # Node slab: [h | x | 0], lane-dense.
    hx = jnp.zeros((N, W_node), jnp.float32)
    hx = hx.at[:, :F].set(h.astype(jnp.float32))
    hx = hx.at[:, F:F + D].set(x.astype(jnp.float32))

    # Fused weight slab: [W_h | W_x | 0]; rows >= F (the x/pad input columns of
    # the gathered slab) stay zero so coordinates cannot leak into the Linear.
    Wcat = jnp.zeros((W_node, W_node), jnp.float32)
    Wcat = Wcat.at[:F, :F].set(W_h.astype(jnp.float32))
    Wcat = Wcat.at[:F, F:F + 1].set(W_x.astype(jnp.float32))
    bcat = jnp.zeros((1, W_node), jnp.float32)
    bcat = bcat.at[0, :F].set(b_h.astype(jnp.float32))
    bcat = bcat.at[0, F:F + 1].set(b_x.astype(jnp.float32).reshape(1))

    grid = (E_pad // tile_e,)

    # Rough VMEM bound (double-buffered tiles + resident operands + temps).
    f32 = 4
    vmem_est = (
        2 * (2 * tile_e * f32)                # row/col tiles
        + 2 * (N * W_node * f32)              # hx
        + 2 * (W_node * W_node * f32)         # Wcat
        + 2 * (W_node * f32)                  # bcat
        + 2 * (N * W_node * f32)              # output slab
        + 2 * (tile_e * N * f32)              # one-hots
        + 6 * (tile_e * W_node * f32)         # gathered / mw / cat temps
    )
    vmem_limit = int(min(max(2 * vmem_est, 8 << 20), 32 << 20))

    kernel = functools.partial(egnn_kernel, F=F, D=D)

    # TODO(synk): for megacore (v7x) add a second "parallel" grid axis over
    # node-output tiles; omitted here since it duplicates per-edge work.
    out = pl.pallas_call(
        kernel,
        out_shape=jax.ShapeDtypeStruct((N, W_node), jnp.float32),
        grid_spec=pltpu.PrefetchScalarGridSpec(
            num_scalar_prefetch=0,
            grid=grid,
            in_specs=[
                pl.BlockSpec((tile_e, 1), lambda k: (k, 0)),        # row
                pl.BlockSpec((tile_e, 1), lambda k: (k, 0)),        # col
                pl.BlockSpec((N, W_node), lambda k: (0, 0)),        # hx (resident)
                pl.BlockSpec((W_node, W_node), lambda k: (0, 0)),   # Wcat
                pl.BlockSpec((1, W_node), lambda k: (0, 0)),        # bcat
            ],
            out_specs=pl.BlockSpec((N, W_node), lambda k: (0, 0)),  # resident acc
        ),
        compiler_params=pltpu.CompilerParams(
            dimension_semantics=("arbitrary",),
            vmem_limit_bytes=vmem_limit,
        ),
    )(row, col, hx, Wcat, bcat)

    return out[:, :F], out[:, F:F + D]


def egnn_layer_ref(h, x, edge_index, W_h, b_h, W_x, b_x):
    """Pure-JAX reference (mirrors the PyTorch forward)."""
    row, col = edge_index[0], edge_index[1]
    N = h.shape[0]
    h_j = h[col]
    delta_x = x[row] - x[col]
    m = jax.nn.relu(h_j @ W_h + b_h)
    agg_h = jax.ops.segment_sum(m, row, num_segments=N)
    h_new = h + agg_h
    w = jax.nn.relu(h_j @ W_x + b_x)
    weighted_delta = delta_x * w
    agg_x = jax.ops.segment_sum(weighted_delta, row, num_segments=N)
    x_new = x + agg_x
    return h_new, x_new


if __name__ == "__main__":
    key = jax.random.PRNGKey(0)
    N, F, D, E = 16, 32, 3, 48          # in_features == out_features == F

    k_h, k_x, k_e, k_wh, k_bh, k_wx, k_bx = jax.random.split(key, 7)
    h = jax.random.normal(k_h, (N, F), dtype=jnp.float32)
    x = jax.random.normal(k_x, (N, D), dtype=jnp.float32)
    edge_index = jax.random.randint(k_e, (2, E), 0, N, dtype=jnp.int32)

    # PyTorch Linear stores [out,in]; we store the transpose so y = h_j @ W + b.
    bound_h = 1.0 / jnp.sqrt(F)
    W_h = jax.random.uniform(k_wh, (F, F), jnp.float32, -bound_h, bound_h)
    b_h = jax.random.uniform(k_bh, (F,), jnp.float32, -bound_h, bound_h)
    W_x = jax.random.uniform(k_wx, (F, 1), jnp.float32, -bound_h, bound_h)
    b_x = jax.random.uniform(k_bx, (1,), jnp.float32, -bound_h, bound_h)

    # tile_e=32 -> 2 edge tiles + 16 inert padded edges: exercises both the
    # multi-step accumulation and the out-of-range padding path.
    h_new, x_new = egnn_layer(h, x, edge_index, W_h, b_h, W_x, b_x, tile_e=32)
    jax.block_until_ready((h_new, x_new))

    h_ref_out, x_ref_out = egnn_layer_ref(h, x, edge_index, W_h, b_h, W_x, b_x)
    assert jnp.allclose(h_new, h_ref_out, atol=1e-4, rtol=1e-4), "h mismatch"
    assert jnp.allclose(x_new, x_ref_out, atol=1e-4, rtol=1e-4), "x mismatch"

    print("KERNEL_OK")
</pallas_src>

<mosaic_0001>
module attributes {stable_mosaic.version = 11 : i64} {
  func.func @egnn_kernel(%arg0: i32, %arg1: memref<32x1xi32, #tpu.memory_space<vmem>>, %arg2: memref<32x1xi32, #tpu.memory_space<vmem>>, %arg3: memref<16x128xf32, #tpu.memory_space<vmem>>, %arg4: memref<128x128xf32, #tpu.memory_space<vmem>>, %arg5: memref<1x128xf32, #tpu.memory_space<vmem>>, %arg6: memref<16x128xf32, #tpu.memory_space<vmem>>) attributes {dimension_semantics = [#tpu.dimension_semantics<arbitrary>], iteration_bounds = array<i64: 2>, scalar_prefetch = 0 : i64, scratch_operands = 0 : i64, tpu.core_type = #tpu.core_type<tc>, window_params = [{transform_indices = @transform_0, window_bounds = array<i64: 32, 1>}, {transform_indices = @transform_1, window_bounds = array<i64: 32, 1>}, {pipeline_mode = #tpu.pipeline_mode<synchronous>, transform_indices = @transform_2, window_bounds = array<i64: 16, 128>}, {pipeline_mode = #tpu.pipeline_mode<synchronous>, transform_indices = @transform_3, window_bounds = array<i64: 128, 128>}, {pipeline_mode = #tpu.pipeline_mode<synchronous>, transform_indices = @transform_4, window_bounds = array<i64: 1, 128>}, {pipeline_mode = #tpu.pipeline_mode<synchronous>, transform_indices = @transform_5, window_bounds = array<i64: 16, 128>}]} {
    %c0_i32 = arith.constant 0 : i32
    %0 = arith.cmpi eq, %arg0, %c0_i32 : i32
    %1 = arith.extui %0 : i1 to i32
    %c0_i32_0 = arith.constant 0 : i32
    %2 = arith.cmpi ne, %1, %c0_i32_0 : i32
    scf.if %2 {
      %c0_21 = arith.constant 0 : index
      %c0_22 = arith.constant 0 : index
      %45 = vector.load %arg3[%c0_21, %c0_22] : memref<16x128xf32, #tpu.memory_space<vmem>>, vector<16x128xf32>
      %c0_23 = arith.constant 0 : index
      %c0_24 = arith.constant 0 : index
      %46 = vector.load %arg6[%c0_23, %c0_24] : memref<16x128xf32, #tpu.memory_space<vmem>>, vector<16x128xf32>
      tpu.vector_store %arg6[%c0_23, %c0_24], %45 {strides = array<i32>} : memref<16x128xf32, #tpu.memory_space<vmem>>, vector<16x128xf32>,
    } else {
    }
    %c0 = arith.constant 0 : index
    %c0_1 = arith.constant 0 : index
    %3 = vector.load %arg1[%c0, %c0_1] : memref<32x1xi32, #tpu.memory_space<vmem>>, vector<32x1xi32>
    %c0_2 = arith.constant 0 : index
    %c0_3 = arith.constant 0 : index
    %4 = vector.load %arg2[%c0_2, %c0_3] : memref<32x1xi32, #tpu.memory_space<vmem>>, vector<32x1xi32>
    %5 = tpu.iota {dimensions = array<i32: 1>} : vector<32x16xi32>
    %6 = vector.broadcast %3 : vector<32x1xi32> to vector<32x16xi32>
    %7 = arith.cmpi eq, %5, %6 : vector<32x16xi32>
    %8 = arith.extui %7 : vector<32x16xi1> to vector<32x16xi32>
    %9 = arith.sitofp %8 : vector<32x16xi32> to vector<32x16xf32>
    %10 = vector.broadcast %4 : vector<32x1xi32> to vector<32x16xi32>
    %11 = arith.cmpi eq, %5, %10 : vector<32x16xi32>
    %12 = arith.extui %11 : vector<32x16xi1> to vector<32x16xi32>
    %13 = arith.sitofp %12 : vector<32x16xi32> to vector<32x16xf32>
    %c0_4 = arith.constant 0 : index
    %c0_5 = arith.constant 0 : index
    %14 = vector.load %arg3[%c0_4, %c0_5] : memref<16x128xf32, #tpu.memory_space<vmem>>, vector<16x128xf32>
    %cst = arith.constant dense<0.000000e+00> : vector<32x128xf32>
    %15 = tpu.matmul %13, %14, %cst {dimension_numbers = #tpu.dot_dimension_numbers<[1], [0], [0], [1], [0, 0, 1, 1], [], []>} : vector<32x16xf32>, vector<16x128xf32>, vector<32x128xf32> -> vector<32x128xf32>
    %cst_6 = arith.constant dense<0.000000e+00> : vector<32x128xf32>
    %16 = tpu.matmul %9, %14, %cst_6 {dimension_numbers = #tpu.dot_dimension_numbers<[1], [0], [0], [1], [0, 0, 1, 1], [], []>} : vector<32x16xf32>, vector<16x128xf32>, vector<32x128xf32> -> vector<32x128xf32>
    %c0_7 = arith.constant 0 : index
    %c0_8 = arith.constant 0 : index
    %17 = vector.load %arg4[%c0_7, %c0_8] : memref<128x128xf32, #tpu.memory_space<vmem>>, vector<128x128xf32>
    %cst_9 = arith.constant dense<0.000000e+00> : vector<32x128xf32>
    %18 = tpu.matmul %15, %17, %cst_9 {dimension_numbers = #tpu.dot_dimension_numbers<[1], [0], [0], [1], [0, 0, 1, 1], [], []>} : vector<32x128xf32>, vector<128x128xf32>, vector<32x128xf32> -> vector<32x128xf32>
    %c0_10 = arith.constant 0 : index
    %c0_11 = arith.constant 0 : index
    %19 = vector.load %arg5[%c0_10, %c0_11] : memref<1x128xf32, #tpu.memory_space<vmem>>, vector<1x128xf32>
    %20 = vector.broadcast %19 : vector<1x128xf32> to vector<32x128xf32>
    %21 = arith.addf %18, %20 : vector<32x128xf32>
    %cst_12 = arith.constant 0.000000e+00 : f32
    %22 = vector.broadcast %cst_12 : f32 to vector<32x128xf32>
    %23 = arith.maximumf %21, %22 : vector<32x128xf32>
    %24 = tpu.iota {dimensions = array<i32: 1>} : vector<32x128xi32>
    %c32_i32 = arith.constant 32 : i32
    %25 = vector.broadcast %c32_i32 : i32 to vector<32x128xi32>
    %26 = arith.cmpi slt, %24, %25 : vector<32x128xi32>
    %cst_13 = arith.constant 0.000000e+00 : f32
    %27 = vector.broadcast %cst_13 : f32 to vector<32x128xf32>
    %28 = arith.select %26, %23, %27 : vector<32x128xi1>, vector<32x128xf32>
    %29 = vector.extract_strided_slice %23 {offsets = [0, 32], sizes = [32, 1], strides = [1, 1]} : vector<32x128xf32> to vector<32x1xf32>
    %c32_i32_14 = arith.constant 32 : i32
    %30 = vector.broadcast %c32_i32_14 : i32 to vector<32x128xi32>
    %31 = arith.cmpi sge, %24, %30 : vector<32x128xi32>
    %c35_i32 = arith.constant 35 : i32
    %32 = vector.broadcast %c35_i32 : i32 to vector<32x128xi32>
    %33 = arith.cmpi slt, %24, %32 : vector<32x128xi32>
    %34 = arith.andi %31, %33 : vector<32x128xi1>
    %35 = arith.subf %16, %15 : vector<32x128xf32>
    %36 = vector.broadcast %29 : vector<32x1xf32> to vector<32x128xf32>
    %37 = arith.mulf %35, %36 : vector<32x128xf32>
    %cst_15 = arith.constant 0.000000e+00 : f32
    %38 = vector.broadcast %cst_15 : f32 to vector<32x128xf32>
    %39 = arith.select %34, %37, %38 : vector<32x128xi1>, vector<32x128xf32>
    %40 = arith.addf %28, %39 : vector<32x128xf32>
    %c0_16 = arith.constant 0 : index
    %c0_17 = arith.constant 0 : index
    %41 = vector.load %arg6[%c0_16, %c0_17] : memref<16x128xf32, #tpu.memory_space<vmem>>, vector<16x128xf32>
    %cst_18 = arith.constant dense<0.000000e+00> : vector<16x128xf32>
    %42 = tpu.matmul %9, %40, %cst_18 {dimension_numbers = #tpu.dot_dimension_numbers<[0], [0], [1], [1], [0, 1, 1, 1], [], []>} : vector<32x16xf32>, vector<32x128xf32>, vector<16x128xf32> -> vector<16x128xf32>
    %43 = arith.addf %41, %42 : vector<16x128xf32>
    %c0_19 = arith.constant 0 : index
    %c0_20 = arith.constant 0 : index
    %44 = vector.load %arg6[%c0_19, %c0_20] : memref<16x128xf32, #tpu.memory_space<vmem>>, vector<16x128xf32>
    tpu.vector_store %arg6[%c0_19, %c0_20], %43 {strides = array<i32>} : memref<16x128xf32, #tpu.memory_space<vmem>>, vector<16x128xf32>,
    return
  }
  func.func @transform_0(%arg0: i32) -> (i32, i32) {
    %c0_i32 = arith.constant 0 : i32
    %c0_i32_0 = arith.constant 0 : i32
    return %arg0, %c0_i32 : i32, i32
  }
  func.func @transform_1(%arg0: i32) -> (i32, i32) {
    %c0_i32 = arith.constant 0 : i32
    %c0_i32_0 = arith.constant 0 : i32
    return %arg0, %c0_i32 : i32, i32
  }
  func.func @transform_2(%arg0: i32) -> (i32, i32) {
    %c0_i32 = arith.constant 0 : i32
    %c0_i32_0 = arith.constant 0 : i32
    %c0_i32_1 = arith.constant 0 : i32
    return %c0_i32, %c0_i32_0 : i32, i32
  }
  func.func @transform_3(%arg0: i32) -> (i32, i32) {
    %c0_i32 = arith.constant 0 : i32
    %c0_i32_0 = arith.constant 0 : i32
    %c0_i32_1 = arith.constant 0 : i32
    return %c0_i32, %c0_i32_0 : i32, i32
  }
  func.func @transform_4(%arg0: i32) -> (i32, i32) {
    %c0_i32 = arith.constant 0 : i32
    %c0_i32_0 = arith.constant 0 : i32
    %c0_i32_1 = arith.constant 0 : i32
    return %c0_i32, %c0_i32_0 : i32, i32
  }
  func.func @transform_5(%arg0: i32) -> (i32, i32) {
    %c0_i32 = arith.constant 0 : i32
    %c0_i32_0 = arith.constant 0 : i32
    %c0_i32_1 = arith.constant 0 : i32
    return %c0_i32, %c0_i32_0 : i32, i32
  }
}

</mosaic_0001>

<llo_original>
// kernel: tpu_custom_call.1
$region0: #{tpu_custom_call.1}
  #allocation0 [shape = 'u32[]', space=smem, size = 0x4, offset = 0x4, fixed_abs, tag = 'smem constant byte address 0x4 - core index']
  #allocation1 [shape = 'u32[144,128]{1,0:T(1,128)}', space=vmem, size = 0x12000, scoped, tag = 'internal scratch']
  %s0 = inlined_call_operand.vmem [shape: s32[64,1], index: 0, kind: input, shape index: {}]
  %s1 = inlined_call_operand.vmem [shape: s32[64,1], index: 1, kind: input, shape index: {}]
  %s2 = inlined_call_operand.hbm [shape: f32[16,128], index: 2, kind: input, shape index: {}]
  %s3 = inlined_call_operand.vmem [shape: f32[128,128], index: 3, kind: input, shape index: {}]
  %s4 = inlined_call_operand.vmem [shape: f32[1,128], index: 4, kind: input, shape index: {}]
  %s5 = inlined_call_operand.hbm [shape: f32[16,128], index: 5, kind: output, shape index: {}]
  %s6 = sld [smem:[#allocation0]]
  $region61: #{tpu_custom_call.1} parent=0
    _
  %s8 = ssub.s32 1, %s6
  %s9 = scalar_select 0, %s8, %s6
  $region1: #{tpu_custom_call.1} parent=0
    #allocation2 [shape = 'u8[8192]{0}', space=vmem, size = 0x2000, scoped, tag = 'input window, operand 2, single buffered']
    #allocation3 [shape = 's32[2]{0}', space=sflag, size = 0x8, scoped, tag = 'scoped memory for tpu_custom_call.1']
    #allocation4 [shape = 's32[2]{0}', space=sflag, size = 0x8, scoped, tag = 'scoped memory for tpu_custom_call.1']
    #allocation5 [shape = 'u8[8192]{0}', space=vmem, size = 0x2000, scoped, tag = 'output window, operand 0, single buffered']
    %10 = vsyncpa [#allocation3], 0
    %11 = vsyncpa [#allocation4], 0
    loop: start=0, step=1, limit=4
    $region2: #{tpu_custom_call.1} parent=1 // loop_pre_header
      _
    $region3: #{tpu_custom_call.1} parent=1 // loop_header
      %s13 = sphi 0, %s17
      %p14 = scmp.ge.s32.totalorder %s13, 4
      %s23 = sphi 0, %s25
      %s26 = sphi 0, %s23
      %s27 = sphi 0, %s26
      %s43 = sphi 0, %s27
      %s49 = sphi 0, %s51
      %s52 = sphi 0, %s49
      %s53 = sphi 0, %s52
      %s69 = sphi 0, %s53
      %s73 = sphi 0, %s73
      %s75 = sphi 0, %s73
      %s76 = sphi 0, %s75
      %s90 = sphi 0, %s76
      %s94 = sphi 0, %s94
      %s96 = sphi 0, %s94
      %s97 = sphi 0, %s96
      %s111 = sphi 0, %s97
      %s115 = sphi 0, %s115
      %s117 = sphi 0, %s115
      %s118 = sphi 0, %s117
      %s132 = sphi 0, %s118
      %s136 = sphi 0, %s136
      %s138 = sphi 0, %s136
      %s139 = sphi 0, %s138
      %s153 = sphi 0, %s139
    $region4: #{tpu_custom_call.1} parent=1 // loop_header_branch
      %16 = sbr.rel (%p14) target = $region8
    $region5: #{tpu_custom_call.1} parent=1 // loop_body
      %s18 = ssub.s32 %s13, 1
      %s19 = ssub.s32 %s13, 2
      %s20 = sadd.s32 %s13, 1
      %s21 = ssub.s32 %s13, %s20
      %p22 = scmp.eq.s32.totalorder %s21, 0
      %s24 = sadd.s32 %s23, 1
      %s25 = scalar_select %p22, %s23, %s24
      %p28 = pneg %p22
      %p29 = scmp.eq.s32.totalorder %s13, 1
      %p30 = por %p28, %p29
      %p31 = scmp.ne.s32.totalorder %s23, %s26
      %p32 = scmp.eq.s32.totalorder %s13, 0
      %p33 = por %p31, %p32
      %p34 = scmp.ne.s32.totalorder %s23, %s26
      %p35 = scmp.eq.s32.totalorder %s18, 1
      %p36 = por %p34, %p35
      %p37 = scmp.ne.s32.totalorder %s26, %s27
      %p38 = scmp.eq.s32.totalorder %s18, 0
      %p39 = por %p37, %p38
      %p40 = scmp.ne.s32.totalorder %s26, %s27
      %p41 = scmp.eq.s32.totalorder %s19, 1
      %p42 = por %p40, %p41
      %p44 = scmp.ne.s32.totalorder %s27, %s43
      %p45 = scmp.eq.s32.totalorder %s19, 0
      %p46 = por %p44, %p45
      %s47 = ssub.s32 %s13, %s20
      %p48 = scmp.eq.s32.totalorder %s47, 0
      %s50 = sadd.s32 %s49, 1
      %s51 = scalar_select %p48, %s49, %s50
      %p54 = pneg %p48
      %p55 = scmp.eq.s32.totalorder %s13, 1
      %p56 = por %p54, %p55
      %p57 = scmp.ne.s32.totalorder %s49, %s52
      %p58 = scmp.eq.s32.totalorder %s13, 0
      %p59 = por %p57, %p58
      %p60 = scmp.ne.s32.totalorder %s49, %s52
      %p61 = scmp.eq.s32.totalorder %s18, 1
      %p62 = por %p60, %p61
      %p63 = scmp.ne.s32.totalorder %s52, %s53
      %p64 = scmp.eq.s32.totalorder %s18, 0
      %p65 = por %p63, %p64
      %p66 = scmp.ne.s32.totalorder %s52, %s53
      %p67 = scmp.eq.s32.totalorder %s19, 1
      %p68 = por %p66, %p67
      %p70 = scmp.ne.s32.totalorder %s53, %s69
      %p71 = scmp.eq.s32.totalorder %s19, 0
      %p72 = por %p70, %p71
      %s74 = sadd.s32 %s73, 1
      %p77 = scmp.eq.s32.totalorder %s13, 1
      %p78 = scmp.ne.s32.totalorder %s73, %s75
      %p79 = scmp.eq.s32.totalorder %s13, 0
      %p80 = por %p78, %p79
      %p81 = scmp.ne.s32.totalorder %s73, %s75
      %p82 = scmp.eq.s32.totalorder %s18, 1
      %p83 = por %p81, %p82
      %p84 = scmp.ne.s32.totalorder %s75, %s76
      %p85 = scmp.eq.s32.totalorder %s18, 0
      %p86 = por %p84, %p85
      %p87 = scmp.ne.s32.totalorder %s75, %s76
      %p88 = scmp.eq.s32.totalorder %s19, 1
      %p89 = por %p87, %p88
      %p91 = scmp.ne.s32.totalorder %s76, %s90
      %p92 = scmp.eq.s32.totalorder %s19, 0
      %p93 = por %p91, %p92
      %s95 = sadd.s32 %s94, 1
      %p98 = scmp.eq.s32.totalorder %s13, 1
      %p99 = scmp.ne.s32.totalorder %s94, %s96
      %p100 = scmp.eq.s32.totalorder %s13, 0
      %p101 = por %p99, %p100
      %p102 = scmp.ne.s32.totalorder %s94, %s96
      %p103 = scmp.eq.s32.totalorder %s18, 1
      %p104 = por %p102, %p103
      %p105 = scmp.ne.s32.totalorder %s96, %s97
      %p106 = scmp.eq.s32.totalorder %s18, 0
      %p107 = por %p105, %p106
      %p108 = scmp.ne.s32.totalorder %s96, %s97
      %p109 = scmp.eq.s32.totalorder %s19, 1
      %p110 = por %p108, %p109
      %p112 = scmp.ne.s32.totalorder %s97, %s111
      %p113 = scmp.eq.s32.totalorder %s19, 0
      %p114 = por %p112, %p113
      %s116 = sadd.s32 %s115, 1
      %p119 = scmp.eq.s32.totalorder %s13, 1
      %p120 = scmp.ne.s32.totalorder %s115, %s117
      %p121 = scmp.eq.s32.totalorder %s13, 0
      %p122 = por %p120, %p121
      %p123 = scmp.ne.s32.totalorder %s115, %s117
      %p124 = scmp.eq.s32.totalorder %s18, 1
      %p125 = por %p123, %p124
      %p126 = scmp.ne.s32.totalorder %s117, %s118
      %p127 = scmp.eq.s32.totalorder %s18, 0
      %p128 = por %p126, %p127
      %p129 = scmp.ne.s32.totalorder %s117, %s118
      %p130 = scmp.eq.s32.totalorder %s19, 1
      %p131 = por %p129, %p130
      %p133 = scmp.ne.s32.totalorder %s118, %s132
      %p134 = scmp.eq.s32.totalorder %s19, 0
      %p135 = por %p133, %p134
      %s137 = sadd.s32 %s136, 1
      %p140 = scmp.eq.s32.totalorder %s13, 1
      %p141 = scmp.ne.s32.totalorder %s136, %s138
      %p142 = scmp.eq.s32.totalorder %s13, 0
      %p143 = por %p141, %p142
      %p144 = scmp.ne.s32.totalorder %s136, %s138
      %p145 = scmp.eq.s32.totalorder %s18, 1
      %p146 = por %p144, %p145
      %p147 = scmp.ne.s32.totalorder %s138, %s139
      %p148 = scmp.eq.s32.totalorder %s18, 0
      %p149 = por %p147, %p148
      %p150 = scmp.ne.s32.totalorder %s138, %s139
      %p151 = scmp.eq.s32.totalorder %s19, 1
      %p152 = por %p150, %p151
      %p154 = scmp.ne.s32.totalorder %s139, %s153
      %p155 = scmp.eq.s32.totalorder %s19, 0
      %p156 = por %p154, %p155
      %p157 = scmp.le.s32.totalorder 1, %s13
      %p158 = scmp.lt.s32.totalorder %s13, 3
      %p159 = pnand %p157, %p158
      %p160 = pneg %p159
      // Predicated region
      $region9: #{tpu_custom_call.1} parent=5 // pred_check
        _
      $region10: #{tpu_custom_call.1} parent=5 // pred_check_branch
        %162 = sbr.rel (%p159) target = $region12
      $region11: #{tpu_custom_call.1} parent=5 // pred_region
        %s163 = ssub.s32 %s13, 1
        // Predicated region
        $region13: #{tpu_custom_call.1} parent=11 // pred_check
          %p164 = pneg %p86
        $region14: #{tpu_custom_call.1} parent=11 // pred_check_branch
          %166 = sbr.rel (%p164) target = $region16
        $region15: #{tpu_custom_call.1} parent=11 // pred_region
          %s168 = ssub.s32 256, 256
          %169 = vsyncadd [#allocation3], %s168
          %s170 = sshll.u32 [#allocation2], 4
          %s171 = int_to_ptr.vmem [resolvable:$true] %s170
          %176 = dma.hbm_to_vmem [thread:$0]  %s2, 256, %s171, [#allocation3], 128, 128, 8
        $region16: #{tpu_custom_call.1} parent=11 // pred_fallthru
          _
        // Predicated region
        $region17: #{tpu_custom_call.1} parent=11 // pred_check
          %p177 = pneg %p107
        $region18: #{tpu_custom_call.1} parent=11 // pred_check_branch
          %179 = sbr.rel (%p177) target = $region20
        $region19: #{tpu_custom_call.1} parent=11 // pred_region
          _
        $region20: #{tpu_custom_call.1} parent=11 // pred_fallthru
          _
        // Predicated region
        $region21: #{tpu_custom_call.1} parent=11 // pred_check
          %p180 = pneg %p128
        $region22: #{tpu_custom_call.1} parent=11 // pred_check_branch
          %182 = sbr.rel (%p180) target = $region24
        $region23: #{tpu_custom_call.1} parent=11 // pred_region
          _
        $region24: #{tpu_custom_call.1} parent=11 // pred_fallthru
          _
      $region12: #{tpu_custom_call.1} parent=5 // pred_fallthru
        _
      %p183 = scmp.lt.s32.totalorder %s13, 2
      // Predicated region
      $region25: #{tpu_custom_call.1} parent=5 // pred_check
        %p184 = pneg %p183
      $region26: #{tpu_custom_call.1} parent=5 // pred_check_branch
        %186 = sbr.rel (%p184) target = $region28
      $region27: #{tpu_custom_call.1} parent=5 // pred_region
        // Predicated region
        $region29: #{tpu_custom_call.1} parent=27 // pred_check
          %p187 = pneg %p33
        $region30: #{tpu_custom_call.1} parent=27 // pred_check_branch
          %189 = sbr.rel (%p187) target = $region32
        $region31: #{tpu_custom_call.1} parent=27 // pred_region
          %s190 = smul.u32 4, %s13
          %p191 = scmp.lt.s32.totalorder %s190, 7
          %s192 = scalar_select %p191, %s190, 7
          %s193 = smul.addr %s192, 8
          %s194 = scalar_lea.vmem %s0, %s193
          %s195 = smul.u32 4, %s13
        $region32: #{tpu_custom_call.1} parent=27 // pred_fallthru
          _
        // Predicated region
        $region33: #{tpu_custom_call.1} parent=27 // pred_check
          %p196 = pneg %p59
        $region34: #{tpu_custom_call.1} parent=27 // pred_check_branch
          %198 = sbr.rel (%p196) target = $region36
        $region35: #{tpu_custom_call.1} parent=27 // pred_region
          %s199 = smul.u32 4, %s13
          %p200 = scmp.lt.s32.totalorder %s199, 7
          %s201 = scalar_select %p200, %s199, 7
          %s202 = smul.addr %s201, 8
          %s203 = scalar_lea.vmem %s1, %s202
          %s204 = smul.u32 4, %s13
        $region36: #{tpu_custom_call.1} parent=27 // pred_fallthru
          _
      $region28: #{tpu_custom_call.1} parent=5 // pred_fallthru
        _
      %p205 = scmp.le.s32.totalorder 1, %s13
      %p206 = scmp.lt.s32.totalorder %s13, 3
      %p207 = pnand %p205, %p206
      %p208 = pneg %p207
      // Predicated region
      $region37: #{tpu_custom_call.1} parent=5 // pred_check
        _
      $region38: #{tpu_custom_call.1} parent=5 // pred_check_branch
        %210 = sbr.rel (%p207) target = $region40
      $region39: #{tpu_custom_call.1} parent=5 // pred_region
        %s211 = ssub.s32 %s13, 1
        // Predicated region
        $region41: #{tpu_custom_call.1} parent=39 // pred_check
          %p212 = pneg %p86
        $region42: #{tpu_custom_call.1} parent=39 // pred_check_branch
          %214 = sbr.rel (%p212) target = $region44
        $region43: #{tpu_custom_call.1} parent=39 // pred_region
          %215 = dma.done [#allocation3], 256
        $region44: #{tpu_custom_call.1} parent=39 // pred_fallthru
          _
        %s216 = smul.u32 4, %s18
        %p217 = scmp.lt.s32.totalorder %s216, 7
        %s218 = scalar_select %p217, %s216, 7
        %s219 = smul.addr %s218, 8
        %s220 = scalar_lea.vmem %s0, %s219
        %p221 = pneg %p39
        %p222 = pneg %p36
        %s223 = smul.u32 4, %s18
        %p224 = scmp.lt.s32.totalorder %s223, 7
        %s225 = scalar_select %p224, %s223, 7
        %s226 = smul.addr %s225, 8
        %s227 = scalar_lea.vmem %s1, %s226
        %p228 = pneg %p65
        %p229 = pneg %p62
        %p230 = pneg %p86
        %p231 = pneg %p83
        %p232 = pneg %p107
        %p233 = pneg %p104
        %p234 = pneg %p128
        %p235 = pneg %p125
        %p236 = pneg %p149
        %p237 = pneg %p146
        %s238 = smul.u32 4, %s18
        %p239 = scmp.lt.s32.totalorder %s238, 7
        %s240 = scalar_select %p239, %s238, 7
        %s241 = smul.addr %s240, 8
        %s242 = scalar_lea.vmem %s0, %s241
        %s243 = smul.u32 4, %s18
        %s244 = smul.u32 4, %s18
        %p245 = scmp.lt.s32.totalorder %s244, 7
        %s246 = scalar_select %p245, %s244, 7
        %s247 = smul.addr %s246, 8
        %s248 = scalar_lea.vmem %s1, %s247
        %s249 = smul.u32 4, %s18
        %p250 = scmp.eq.s32.totalorder %s18, 0
        // Predicated region
        $region45: #{tpu_custom_call.1} parent=39 // pred_check
          %p251 = pneg %p250
        $region46: #{tpu_custom_call.1} parent=39 // pred_check_branch
          %253 = sbr.rel (%p251) target = $region48
        $region47: #{tpu_custom_call.1} parent=39 // pred_region
          %v254 = vld [vmem:[#allocation2] sm:$0xff]
          %v255 = vld [vmem:[#allocation2 + $0x8] sm:$0xff]
          %256 = vst [vmem:[#allocation5] sm:$0xff] %v254
          %257 = vst [vmem:[#allocation5 + $0x8] sm:$0xff] %v255
        $region48: #{tpu_custom_call.1} parent=39 // pred_fallthru
          _
        %v258 = vld [vmem:[%s242] sm:$0xff]
        %v259 = vld [vmem:[%s242 + $0x8] sm:$0xff]
        %v260 = vld [vmem:[%s242 + $0x10] sm:$0xff]
        %v261 = vld [vmem:[%s242 + $0x18] sm:$0xff]
        %v262 = vld [vmem:[%s248] sm:$0xff]
        %v263 = vld [vmem:[%s248 + $0x8] sm:$0xff]
        %v264 = vld [vmem:[%s248 + $0x10] sm:$0xff]
        %v265 = vld [vmem:[%s248 + $0x18] sm:$0xff]
        %v266 = vlaneseq
        %v267 = vand.u32 %v266, 127
        %268 = vset.pattern.permute.xlu0 0
        %269 = vperm.xlu0 %268, %v258
        %v270 = vpop.permute.xlu0 %269
        %271 = vset.pattern.permute.xlu0 0
        %272 = vperm.xlu0 %271, %v259
        %v273 = vpop.permute.xlu0 %272
        %274 = vset.pattern.permute.xlu0 0
        %275 = vperm.xlu0 %274, %v260
        %v276 = vpop.permute.xlu0 %275
        %277 = vset.pattern.permute.xlu0 0
        %278 = vperm.xlu0 %277, %v261
        %v279 = vpop.permute.xlu0 %278
        %vm280 = vcmp.eq.s32.totalorder %v267, %v270
        %vm281 = vcmp.eq.s32.totalorder %v267, %v273
        %vm282 = vcmp.eq.s32.totalorder %v267, %v276
        %vm283 = vcmp.eq.s32.totalorder %v267, %v279
        %v284 = vsel %vm280, 1, 0
        %v285 = vsel %vm281, 1, 0
        %v286 = vsel %vm282, 1, 0
        %v287 = vsel %vm283, 1, 0
        %v288 = vcvt.s32.f32 %v284
        %v289 = vcvt.s32.f32 %v285
        %v290 = vcvt.s32.f32 %v286
        %v291 = vcvt.s32.f32 %v287
        %292 = vset.pattern.permute.xlu0 0
        %293 = vperm.xlu0 %292, %v262
        %v294 = vpop.permute.xlu0 %293
        %295 = vset.pattern.permute.xlu0 0
        %296 = vperm.xlu0 %295, %v263
        %v297 = vpop.permute.xlu0 %296
        %298 = vset.pattern.permute.xlu0 0
        %299 = vperm.xlu0 %298, %v264
        %v300 = vpop.permute.xlu0 %299
        %301 = vset.pattern.permute.xlu0 0
        %302 = vperm.xlu0 %301, %v265
        %v303 = vpop.permute.xlu0 %302
        %vm304 = vcmp.eq.s32.totalorder %v267, %v294
        %vm305 = vcmp.eq.s32.totalorder %v267, %v297
        %vm306 = vcmp.eq.s32.totalorder %v267, %v300
        %vm307 = vcmp.eq.s32.totalorder %v267, %v303
        %v308 = vsel %vm304, 1, 0
        %v309 = vsel %vm305, 1, 0
        %v310 = vsel %vm306, 1, 0
        %v311 = vsel %vm307, 1, 0
        %v312 = vcvt.s32.f32 %v308
        %v313 = vcvt.s32.f32 %v309
        %v314 = vcvt.s32.f32 %v310
        %v315 = vcvt.s32.f32 %v311
        %v316 = vld [vmem:[#allocation2] sm:$0xff]
        %v317 = vld [vmem:[#allocation2 + $0x8] sm:$0xff]
        %vm318 = vcmask 130048
        %v320 = vsel %vm318, %v312, 0
        %v323 = vsel %vm318, %v313, 0
        %v326 = vsel %vm318, %v314, 0
        %v329 = vsel %vm318, %v315, 0
        %331 = vmatprep.subr.mxu0 0.0
        %332 = vmatpush1.msra.mxu0 %v316
        %333 = vmatprep.subr.mxu0 0.0
        %334 = vmatpush1.msra.mxu0 %v317
        %335 = vmatprep.subr.mxu0 0.0
        %336 = vmatpush1.msra.mxu0 0.0
        %337 = vmatprep.subr.mxu0 0.0
        %338 = vmatpush1.msra.mxu0 0.0
        %339 = vmatprep.subr.mxu0 0.0
        %340 = vmatpush1.msra.mxu0 0.0
        %341 = vmatprep.subr.mxu0 0.0
        %342 = vmatpush1.msra.mxu0 0.0
        %343 = vmatprep.subr.mxu0 0.0
        %344 = vmatpush1.msra.mxu0 0.0
        %345 = vmatprep.subr.mxu0 0.0
        %346 = vmatpush1.msra.mxu0 0.0
        %347 = vmatprep.subr.mxu0 0.0
        %348 = vmatpush1.msra.mxu0 0.0
        %349 = vmatprep.subr.mxu0 0.0
        %350 = vmatpush1.msra.mxu0 0.0
        %351 = vmatprep.subr.mxu0 0.0
        %352 = vmatpush1.msra.mxu0 0.0
        %353 = vmatprep.subr.mxu0 0.0
        %354 = vmatpush1.msra.mxu0 0.0
        %355 = vmatprep.subr.mxu0 0.0
        %356 = vmatpush1.msra.mxu0 0.0
        %357 = vmatprep.subr.mxu0 0.0
        %358 = vmatpush1.msra.mxu0 0.0
        %359 = vmatprep.subr.mxu0 0.0
        %360 = vmatpush1.msra.mxu0 0.0
        %361 = vmatprep.subr.mxu0 0.0
        %362 = vmatpush1.msra.mxu0 0.0
        %363 = vmatprep.subr.mxu0 0.0
        %364 = vmatpush1.msra.mxu0 0.0
        %365 = vmatprep.subr.mxu0 0.0
        %366 = vmatpush1.msra.mxu0 0.0
        %367 = vmatprep.subr.mxu0 0.0
        %368 = vmatpush1.msra.mxu0 0.0
        %369 = vmatprep.subr.mxu0 0.0
        %370 = vmatpush1.msra.mxu0 0.0
        %371 = vmatprep.subr.mxu0 0.0
        %372 = vmatpush1.msra.mxu0 0.0
        %373 = vmatprep.subr.mxu0 0.0
        %374 = vmatpush1.msra.mxu0 0.0
        %375 = vmatprep.subr.mxu0 0.0
        %376 = vmatpush1.msra.mxu0 0.0
        %377 = vmatprep.subr.mxu0 0.0
        %378 = vmatpush1.msra.mxu0 0.0
        %379 = vmatprep.subr.mxu0 0.0
        %380 = vmatpush1.msra.mxu0 0.0
        %381 = vmatprep.subr.mxu0 0.0
        %382 = vmatpush1.msra.mxu0 0.0
        %383 = vmatprep.subr.mxu0 0.0
        %384 = vmatpush1.msra.mxu0 0.0
        %385 = vmatprep.subr.mxu0 0.0
        %386 = vmatpush1.msra.mxu0 0.0
        %387 = vmatprep.subr.mxu0 0.0
        %388 = vmatpush1.msra.mxu0 0.0
        %389 = vmatprep.subr.mxu0 0.0
        %390 = vmatpush1.msra.mxu0 0.0
        %391 = vmatprep.subr.mxu0 0.0
        %392 = vmatpush1.msra.mxu0 0.0
        %393 = vmatprep.subr.mxu0 0.0
        %394 = vmatpush1.msra.mxu0 0.0
        %395 = vmatprep.mubr.f32.mxu0 0.0
        %396 = vmatmul.mubr.f32.gmra.mrb[0].mxu0 %v320
        %v397 = vpop.f32.mrb[0].mxu0
        %v398 = vadd.f32 0.0, %v397
        %v399 = vpop.f32.mrb[0].mxu0
        %400 = vmatprep.mubr.f32.mxu0 0.0
        %401 = vmatmul.mubr.f32.gmra.mrb[0].mxu0 %v323
        %v402 = vpop.f32.mrb[0].mxu0
        %v403 = vadd.f32 0.0, %v402
        %v404 = vpop.f32.mrb[0].mxu0
        %405 = vmatprep.mubr.f32.mxu0 0.0
        %406 = vmatmul.mubr.f32.gmra.mrb[0].mxu0 %v326
        %v407 = vpop.f32.mrb[0].mxu0
        %v408 = vadd.f32 0.0, %v407
        %v409 = vpop.f32.mrb[0].mxu0
        %410 = vmatprep.mubr.f32.mxu0 0.0
        %411 = vmatmul.mubr.f32.gmra.mrb[0].mxu0 %v329
        %v412 = vpop.f32.mrb[0].mxu0
        %v413 = vadd.f32 0.0, %v412
        %v414 = vpop.f32.mrb[0].mxu0
        %415 = vdwg.mxu0
        %v417 = vsel %vm318, %v288, 0
        %v420 = vsel %vm318, %v289, 0
        %v423 = vsel %vm318, %v290, 0
        %v426 = vsel %vm318, %v291, 0
        %428 = vmatprep.subr.mxu0 0.0
        %429 = vmatpush1.msra.mxu0 %v316
        %430 = vmatprep.subr.mxu0 0.0
        %431 = vmatpush1.msra.mxu0 %v317
        %432 = vmatprep.subr.mxu0 0.0
        %433 = vmatpush1.msra.mxu0 0.0
        %434 = vmatprep.subr.mxu0 0.0
        %435 = vmatpush1.msra.mxu0 0.0
        %436 = vmatprep.subr.mxu0 0.0
        %437 = vmatpush1.msra.mxu0 0.0
        %438 = vmatprep.subr.mxu0 0.0
        %439 = vmatpush1.msra.mxu0 0.0
        %440 = vmatprep.subr.mxu0 0.0
        %441 = vmatpush1.msra.mxu0 0.0
        %442 = vmatprep.subr.mxu0 0.0
        %443 = vmatpush1.msra.mxu0 0.0
        %444 = vmatprep.subr.mxu0 0.0
        %445 = vmatpush1.msra.mxu0 0.0
        %446 = vmatprep.subr.mxu0 0.0
        %447 = vmatpush1.msra.mxu0 0.0
        %448 = vmatprep.subr.mxu0 0.0
        %449 = vmatpush1.msra.mxu0 0.0
        %450 = vmatprep.subr.mxu0 0.0
        %451 = vmatpush1.msra.mxu0 0.0
        %452 = vmatprep.subr.mxu0 0.0
        %453 = vmatpush1.msra.mxu0 0.0
        %454 = vmatprep.subr.mxu0 0.0
        %455 = vmatpush1.msra.mxu0 0.0
        %456 = vmatprep.subr.mxu0 0.0
        %457 = vmatpush1.msra.mxu0 0.0
        %458 = vmatprep.subr.mxu0 0.0
        %459 = vmatpush1.msra.mxu0 0.0
        %460 = vmatprep.subr.mxu0 0.0
        %461 = vmatpush1.msra.mxu0 0.0
        %462 = vmatprep.subr.mxu0 0.0
        %463 = vmatpush1.msra.mxu0 0.0
        %464 = vmatprep.subr.mxu0 0.0
        %465 = vmatpush1.msra.mxu0 0.0
        %466 = vmatprep.subr.mxu0 0.0
        %467 = vmatpush1.msra.mxu0 0.0
        %468 = vmatprep.subr.mxu0 0.0
        %469 = vmatpush1.msra.mxu0 0.0
        %470 = vmatprep.subr.mxu0 0.0
        %471 = vmatpush1.msra.mxu0 0.0
        %472 = vmatprep.subr.mxu0 0.0
        %473 = vmatpush1.msra.mxu0 0.0
        %474 = vmatprep.subr.mxu0 0.0
        %475 = vmatpush1.msra.mxu0 0.0
        %476 = vmatprep.subr.mxu0 0.0
        %477 = vmatpush1.msra.mxu0 0.0
        %478 = vmatprep.subr.mxu0 0.0
        %479 = vmatpush1.msra.mxu0 0.0
        %480 = vmatprep.subr.mxu0 0.0
        %481 = vmatpush1.msra.mxu0 0.0
        %482 = vmatprep.subr.mxu0 0.0
        %483 = vmatpush1.msra.mxu0 0.0
        %484 = vmatprep.subr.mxu0 0.0
        %485 = vmatpush1.msra.mxu0 0.0
        %486 = vmatprep.subr.mxu0 0.0
        %487 = vmatpush1.msra.mxu0 0.0
        %488 = vmatprep.subr.mxu0 0.0
        %489 = vmatpush1.msra.mxu0 0.0
        %490 = vmatprep.subr.mxu0 0.0
        %491 = vmatpush1.msra.mxu0 0.0
        %492 = vmatprep.mubr.f32.mxu0 0.0
        %493 = vmatmul.mubr.f32.gmra.mrb[0].mxu0 %v417
        %v494 = vpop.f32.mrb[0].mxu0
        %v495 = vadd.f32 0.0, %v494
        %v496 = vpop.f32.mrb[0].mxu0
        %497 = vmatprep.mubr.f32.mxu0 0.0
        %498 = vmatmul.mubr.f32.gmra.mrb[0].mxu0 %v420
        %v499 = vpop.f32.mrb[0].mxu0
        %v500 = vadd.f32 0.0, %v499
        %v501 = vpop.f32.mrb[0].mxu0
        %502 = vmatprep.mubr.f32.mxu0 0.0
        %503 = vmatmul.mubr.f32.gmra.mrb[0].mxu0 %v423
        %v504 = vpop.f32.mrb[0].mxu0
        %v505 = vadd.f32 0.0, %v504
        %v506 = vpop.f32.mrb[0].mxu0
        %507 = vmatprep.mubr.f32.mxu0 0.0
        %508 = vmatmul.mubr.f32.gmra.mrb[0].mxu0 %v426
        %v509 = vpop.f32.mrb[0].mxu0
        %v510 = vadd.f32 0.0, %v509
        %v511 = vpop.f32.mrb[0].mxu0
        %512 = vdwg.mxu0
        %v513 = vld [vmem:[%s3] sm:$0xff]
        %v514 = vld [vmem:[%s3 + $0x8] sm:$0xff]
        %v515 = vld [vmem:[%s3 + $0x10] sm:$0xff]
        %v516 = vld [vmem:[%s3 + $0x18] sm:$0xff]
        %v517 = vld [vmem:[%s3 + $0x20] sm:$0xff]
        %v518 = vld [vmem:[%s3 + $0x28] sm:$0xff]
        %v519 = vld [vmem:[%s3 + $0x30] sm:$0xff]
        %v520 = vld [vmem:[%s3 + $0x38] sm:$0xff]
        %v521 = vld [vmem:[%s3 + $0x40] sm:$0xff]
        %v522 = vld [vmem:[%s3 + $0x48] sm:$0xff]
        %v523 = vld [vmem:[%s3 + $0x50] sm:$0xff]
        %v524 = vld [vmem:[%s3 + $0x58] sm:$0xff]
        %v525 = vld [vmem:[%s3 + $0x60] sm:$0xff]
        %v526 = vld [vmem:[%s3 + $0x68] sm:$0xff]
        %v527 = vld [vmem:[%s3 + $0x70] sm:$0xff]
        %v528 = vld [vmem:[%s3 + $0x78] sm:$0xff]
        %v529 = vld [vmem:[%s4] sm:$0x1]
        %v531 = vlaneseq
        %v532 = vshrl.u32 %v531, 7
        %v533 = vsub.s32 0, %v532
        %v534 = vrot.slane %v529, %v533
        %536 = vmatprep.subr.mxu0 0.0
        %537 = vmatpush1.msra.mxu0 %v513
        %538 = vmatprep.subr.mxu0 0.0
        %539 = vmatpush1.msra.mxu0 %v514
        %540 = vmatprep.subr.mxu0 0.0
        %541 = vmatpush1.msra.mxu0 %v515
        %542 = vmatprep.subr.mxu0 0.0
        %543 = vmatpush1.msra.mxu0 %v516
        %544 = vmatprep.subr.mxu0 0.0
        %545 = vmatpush1.msra.mxu0 %v517
        %546 = vmatprep.subr.mxu0 0.0
        %547 = vmatpush1.msra.mxu0 %v518
        %548 = vmatprep.subr.mxu0 0.0
        %549 = vmatpush1.msra.mxu0 %v519
        %550 = vmatprep.subr.mxu0 0.0
        %551 = vmatpush1.msra.mxu0 %v520
        %552 = vmatprep.subr.mxu0 0.0
        %553 = vmatpush1.msra.mxu0 %v521
        %554 = vmatprep.subr.mxu0 0.0
        %555 = vmatpush1.msra.mxu0 %v522
        %556 = vmatprep.subr.mxu0 0.0
        %557 = vmatpush1.msra.mxu0 %v523
        %558 = vmatprep.subr.mxu0 0.0
        %559 = vmatpush1.msra.mxu0 %v524
        %560 = vmatprep.subr.mxu0 0.0
        %561 = vmatpush1.msra.mxu0 %v525
        %562 = vmatprep.subr.mxu0 0.0
        %563 = vmatpush1.msra.mxu0 %v526
        %564 = vmatprep.subr.mxu0 0.0
        %565 = vmatpush1.msra.mxu0 %v527
        %566 = vmatprep.subr.mxu0 0.0
        %567 = vmatpush1.msra.mxu0 %v528
        %568 = vmatprep.subr.mxu0 0.0
        %569 = vmatpush1.msra.mxu0 0.0
        %570 = vmatprep.subr.mxu0 0.0
        %571 = vmatpush1.msra.mxu0 0.0
        %572 = vmatprep.subr.mxu0 0.0
        %573 = vmatpush1.msra.mxu0 0.0
        %574 = vmatprep.subr.mxu0 0.0
        %575 = vmatpush1.msra.mxu0 0.0
        %576 = vmatprep.subr.mxu0 0.0
        %577 = vmatpush1.msra.mxu0 0.0
        %578 = vmatprep.subr.mxu0 0.0
        %579 = vmatpush1.msra.mxu0 0.0
        %580 = vmatprep.subr.mxu0 0.0
        %581 = vmatpush1.msra.mxu0 0.0
        %582 = vmatprep.subr.mxu0 0.0
        %583 = vmatpush1.msra.mxu0 0.0
        %584 = vmatprep.subr.mxu0 0.0
        %585 = vmatpush1.msra.mxu0 0.0
        %586 = vmatprep.subr.mxu0 0.0
        %587 = vmatpush1.msra.mxu0 0.0
        %588 = vmatprep.subr.mxu0 0.0
        %589 = vmatpush1.msra.mxu0 0.0
        %590 = vmatprep.subr.mxu0 0.0
        %591 = vmatpush1.msra.mxu0 0.0
        %592 = vmatprep.subr.mxu0 0.0
        %593 = vmatpush1.msra.mxu0 0.0
        %594 = vmatprep.subr.mxu0 0.0
        %595 = vmatpush1.msra.mxu0 0.0
        %596 = vmatprep.subr.mxu0 0.0
        %597 = vmatpush1.msra.mxu0 0.0
        %598 = vmatprep.subr.mxu0 0.0
        %599 = vmatpush1.msra.mxu0 0.0
        %600 = vmatprep.mubr.f32.mxu0 0.0
        %601 = vmatmul.mubr.f32.gmra.mrb[0].mxu0 %v398
        %v602 = vpop.f32.mrb[0].mxu0
        %v603 = vadd.f32 %v534, %v602
        %v604 = vpop.f32.mrb[0].mxu0
        %605 = vmatprep.mubr.f32.mxu0 0.0
        %606 = vmatmul.mubr.f32.gmra.mrb[0].mxu0 %v403
        %v607 = vpop.f32.mrb[0].mxu0
        %v608 = vadd.f32 %v534, %v607
        %v609 = vpop.f32.mrb[0].mxu0
        %610 = vmatprep.mubr.f32.mxu0 0.0
        %611 = vmatmul.mubr.f32.gmra.mrb[0].mxu0 %v408
        %v612 = vpop.f32.mrb[0].mxu0
        %v613 = vadd.f32 %v534, %v612
        %v614 = vpop.f32.mrb[0].mxu0
        %615 = vmatprep.mubr.f32.mxu0 0.0
        %616 = vmatmul.mubr.f32.gmra.mrb[0].mxu0 %v413
        %v617 = vpop.f32.mrb[0].mxu0
        %v618 = vadd.f32 %v534, %v617
        %v619 = vpop.f32.mrb[0].mxu0
        %620 = vdwg.mxu0
        %v621 = vmax.f32 %v603, 0.0
        %v622 = vmax.f32 %v608, 0.0
        %v623 = vmax.f32 %v613, 0.0
        %v624 = vmax.f32 %v618, 0.0
        %vm625 = vcmp.lt.s32.totalorder %v267, 32
        %v626 = vsel %vm625, %v621, 0.0
        %v627 = vsel %vm625, %v622, 0.0
        %v628 = vsel %vm625, %v623, 0.0
        %v629 = vsel %vm625, %v624, 0.0
        %vm630 = vcmp.ge.s32.totalorder %v267, 32
        %vm631 = vcmp.lt.s32.totalorder %v267, 35
        %vm632 = vmand %vm630, %vm631
        %v633 = vsub.f32 %v495, %v398
        %v634 = vsub.f32 %v500, %v403
        %v635 = vsub.f32 %v505, %v408
        %v636 = vsub.f32 %v510, %v413
        %638 = vset.pattern.permute.xlu0 32
        %639 = vperm.xlu0 %638, %v621
        %v640 = vpop.permute.xlu0 %639
        %643 = vset.pattern.permute.xlu0 32
        %644 = vperm.xlu0 %643, %v622
        %v645 = vpop.permute.xlu0 %644
        %648 = vset.pattern.permute.xlu0 32
        %649 = vperm.xlu0 %648, %v623
        %v650 = vpop.permute.xlu0 %649
        %653 = vset.pattern.permute.xlu0 32
        %654 = vperm.xlu0 %653, %v624
        %v655 = vpop.permute.xlu0 %654
        %v657 = vmul.f32 %v633, %v640
        %v658 = vmul.f32 %v634, %v645
        %v659 = vmul.f32 %v635, %v650
        %v660 = vmul.f32 %v636, %v655
        %v661 = vsel %vm632, %v657, 0.0
        %v662 = vsel %vm632, %v658, 0.0
        %v663 = vsel %vm632, %v659, 0.0
        %v664 = vsel %vm632, %v660, 0.0
        %v665 = vadd.f32 %v626, %v661
        %v666 = vadd.f32 %v627, %v662
        %v667 = vadd.f32 %v628, %v663
        %v668 = vadd.f32 %v629, %v664
        %v669 = vld [vmem:[#allocation5] sm:$0xff]
        %v670 = vld [vmem:[#allocation5 + $0x8] sm:$0xff]
        %671 = vxpose.xlu0.b32.start [1/16] %v288, 128
        %672 = vxpose.xlu0.b32.cont [2/16] %v289, 128
        %673 = vxpose.xlu0.b32.cont [3/16] %v290, 128
        %674 = vxpose.xlu0.b32.cont [4/16] %v291, 128
        %675 = vxpose.xlu0.b32.cont [5/16] 0.0, 128
        %676 = vxpose.xlu0.b32.cont [6/16] 0.0, 128
        %677 = vxpose.xlu0.b32.cont [7/16] 0.0, 128
        %678 = vxpose.xlu0.b32.cont [8/16] 0.0, 128
        %679 = vxpose.xlu0.b32.cont [9/16] 0.0, 128
        %680 = vxpose.xlu0.b32.cont [10/16] 0.0, 128
        %681 = vxpose.xlu0.b32.cont [11/16] 0.0, 128
        %682 = vxpose.xlu0.b32.cont [12/16] 0.0, 128
        %683 = vxpose.xlu0.b32.cont [13/16] 0.0, 128
        %684 = vxpose.xlu0.b32.cont [14/16] 0.0, 128
        %685 = vxpose.xlu0.b32.cont [15/16] 0.0, 128
        %686 = vxpose.xlu0.b32.end [16/16] 0.0, 128
        %v687 = vpop.trf.xlu0
        %v688 = vpop.trf.xlu0
        %v689 = vpop.trf.xlu0
        %v690 = vpop.trf.xlu0
        %v691 = vpop.trf.xlu0
        %v692 = vpop.trf.xlu0
        %v693 = vpop.trf.xlu0
        %v694 = vpop.trf.xlu0
        %v695 = vpop.trf.xlu0
        %v696 = vpop.trf.xlu0
        %v697 = vpop.trf.xlu0
        %v698 = vpop.trf.xlu0
        %v699 = vpop.trf.xlu0
        %v700 = vpop.trf.xlu0
        %v701 = vpop.trf.xlu0
        %v702 = vpop.trf.xlu0
        %vm703 = vcmask 261120
        %v705 = vsel %vm703, %v687, 0
        %v708 = vsel %vm703, %v688, 0
        %710 = vmatprep.subr.mxu0 0.0
        %711 = vmatpush1.msra.mxu0 %v665
        %712 = vmatprep.subr.mxu0 0.0
        %713 = vmatpush1.msra.mxu0 %v666
        %714 = vmatprep.subr.mxu0 0.0
        %715 = vmatpush1.msra.mxu0 %v667
        %716 = vmatprep.subr.mxu0 0.0
        %717 = vmatpush1.msra.mxu0 %v668
        %718 = vmatprep.subr.mxu0 0.0
        %719 = vmatpush1.msra.mxu0 0.0
        %720 = vmatprep.subr.mxu0 0.0
        %721 = vmatpush1.msra.mxu0 0.0
        %722 = vmatprep.subr.mxu0 0.0
        %723 = vmatpush1.msra.mxu0 0.0
        %724 = vmatprep.subr.mxu0 0.0
        %725 = vmatpush1.msra.mxu0 0.0
        %726 = vmatprep.subr.mxu0 0.0
        %727 = vmatpush1.msra.mxu0 0.0
        %728 = vmatprep.subr.mxu0 0.0
        %729 = vmatpush1.msra.mxu0 0.0
        %730 = vmatprep.subr.mxu0 0.0
        %731 = vmatpush1.msra.mxu0 0.0
        %732 = vmatprep.subr.mxu0 0.0
        %733 = vmatpush1.msra.mxu0 0.0
        %734 = vmatprep.subr.mxu0 0.0
        %735 = vmatpush1.msra.mxu0 0.0
        %736 = vmatprep.subr.mxu0 0.0
        %737 = vmatpush1.msra.mxu0 0.0
        %738 = vmatprep.subr.mxu0 0.0
        %739 = vmatpush1.msra.mxu0 0.0
        %740 = vmatprep.subr.mxu0 0.0
        %741 = vmatpush1.msra.mxu0 0.0
        %742 = vmatprep.subr.mxu0 0.0
        %743 = vmatpush1.msra.mxu0 0.0
        %744 = vmatprep.subr.mxu0 0.0
        %745 = vmatpush1.msra.mxu0 0.0
        %746 = vmatprep.subr.mxu0 0.0
        %747 = vmatpush1.msra.mxu0 0.0
        %748 = vmatprep.subr.mxu0 0.0
        %749 = vmatpush1.msra.mxu0 0.0
        %750 = vmatprep.subr.mxu0 0.0
        %751 = vmatpush1.msra.mxu0 0.0
        %752 = vmatprep.subr.mxu0 0.0
        %753 = vmatpush1.msra.mxu0 0.0
        %754 = vmatprep.subr.mxu0 0.0
        %755 = vmatpush1.msra.mxu0 0.0
        %756 = vmatprep.subr.mxu0 0.0
        %757 = vmatpush1.msra.mxu0 0.0
        %758 = vmatprep.subr.mxu0 0.0
        %759 = vmatpush1.msra.mxu0 0.0
        %760 = vmatprep.subr.mxu0 0.0
        %761 = vmatpush1.msra.mxu0 0.0
        %762 = vmatprep.subr.mxu0 0.0
        %763 = vmatpush1.msra.mxu0 0.0
        %764 = vmatprep.subr.mxu0 0.0
        %765 = vmatpush1.msra.mxu0 0.0
        %766 = vmatprep.subr.mxu0 0.0
        %767 = vmatpush1.msra.mxu0 0.0
        %768 = vmatprep.subr.mxu0 0.0
        %769 = vmatpush1.msra.mxu0 0.0
        %770 = vmatprep.subr.mxu0 0.0
        %771 = vmatpush1.msra.mxu0 0.0
        %772 = vmatprep.subr.mxu0 0.0
        %773 = vmatpush1.msra.mxu0 0.0
        %774 = vmatprep.mubr.f32.mxu0 0.0
        %775 = vmatmul.mubr.f32.gmra.mrb[0].mxu0 %v705
        %v776 = vpop.f32.mrb[0].mxu0
        %v777 = vadd.f32 0.0, %v776
        %v778 = vpop.f32.mrb[0].mxu0
        %779 = vmatprep.mubr.f32.mxu0 0.0
        %780 = vmatmul.mubr.f32.gmra.mrb[0].mxu0 %v708
        %v781 = vpop.f32.mrb[0].mxu0
        %v782 = vadd.f32 0.0, %v781
        %v783 = vpop.f32.mrb[0].mxu0
        %784 = vdwg.mxu0
        %v785 = vadd.f32 %v669, %v777
        %v786 = vadd.f32 %v670, %v782
        %787 = vst [vmem:[#allocation5] sm:$0xff] %v785
        %788 = vst [vmem:[#allocation5 + $0x8] sm:$0xff] %v786
        // Predicated region
        $region49: #{tpu_custom_call.1} parent=39 // pred_check
          %p789 = pneg %p146
        $region50: #{tpu_custom_call.1} parent=39 // pred_check_branch
          %791 = sbr.rel (%p789) target = $region52
        $region51: #{tpu_custom_call.1} parent=39 // pred_region
          %s793 = ssub.s32 256, 256
          %794 = vsyncadd [#allocation4], %s793
          %s795 = sshll.u32 [#allocation5], 4
          %s796 = int_to_ptr.vmem [resolvable:$true] %s795
          %801 = dma.vmem_to_hbm [thread:$0]  %s796, 256, %s5, [#allocation4], 128, 128, 8
        $region52: #{tpu_custom_call.1} parent=39 // pred_fallthru
          _
        // Predicated region
        $region53: #{tpu_custom_call.1} parent=39 // pred_check
          %p802 = pneg %p146
        $region54: #{tpu_custom_call.1} parent=39 // pred_check_branch
          %804 = sbr.rel (%p802) target = $region56
        $region55: #{tpu_custom_call.1} parent=39 // pred_region
          %805 = dma.done [#allocation4], 256
        $region56: #{tpu_custom_call.1} parent=39 // pred_fallthru
          _
      $region40: #{tpu_custom_call.1} parent=5 // pred_fallthru
        _
      %p806 = scmp.le.s32.totalorder 2, %s13
      // Predicated region
      $region57: #{tpu_custom_call.1} parent=5 // pred_check
        %p807 = pneg %p806
      $region58: #{tpu_custom_call.1} parent=5 // pred_check_branch
        %809 = sbr.rel (%p807) target = $region60
      $region59: #{tpu_custom_call.1} parent=5 // pred_region
        %s810 = ssub.s32 %s13, 2
      $region60: #{tpu_custom_call.1} parent=5 // pred_fallthru
        _
    $region6: #{tpu_custom_call.1} parent=1 // loop_footer
      %s17 = sadd.s32 1, %s13
    $region7: #{tpu_custom_call.1} parent=1 // loop_footer_branch
      %12 = sbr.rel target = $region3
    $region8: #{tpu_custom_call.1} parent=1 // loop_exit
      _
    %811 = vsyncpa [#allocation3], 1
    %s812 = scalar_lea.sflag [#allocation3], 1
    %813 = vsyncpa %s812, 1
    %814 = vsyncpa [#allocation4], 1
    %s815 = scalar_lea.sflag [#allocation4], 1
    %816 = vsyncpa %s815, 1

</llo_original>
